<compile_context>
chip_gen: v7x
topology: tpu7x:2x2x1
jax: 0.10.0
libtpu: 0.0.40
codegen_flags: <defaults>
</compile_context>

<pallas_src>
import jax
import jax.numpy as jnp
from jax.experimental import pallas as pl
from jax.experimental.pallas import tpu as pltpu

EPS = 1e-5


def linear_bn_relu_kernel(x_ref, w_ref, gb_ref, o_ref):
    # x_ref:  (B, K)  f32   (cast to bf16 in-kernel -> no separate XLA convert launch)
    # w_ref:  (K, N)  bf16  (pre-transposed weight, prepared once at init time)
    # gb_ref: (2, N)  f32   (row 0 = gamma, row 1 = beta; packed -> one fewer DMA stream)
    # o_ref:  (B, N)  f32
    x_bf16 = x_ref[...].astype(jnp.bfloat16)
    y = jnp.dot(x_bf16, w_ref[...], preferred_element_type=jnp.float32)  # MXU, f32 acc

    # Training-mode BatchNorm1d batch statistics (biased variance). Mean-subtracted
    # sum-of-squares avoids the E[y^2] - mean^2 cancellation issue.
    inv_b = 1.0 / y.shape[0]
    mean = jnp.sum(y, axis=0, keepdims=True) * inv_b            # (1, N)
    yc = y - mean
    var = jnp.sum(yc * yc, axis=0, keepdims=True) * inv_b       # (1, N)
    inv_std = jax.lax.rsqrt(var + EPS)

    gamma = gb_ref[0:1, :]                                      # static ref slice: free
    beta = gb_ref[1:2, :]
    o_ref[...] = jnp.maximum(yc * (gamma * inv_std) + beta, 0.0).astype(o_ref.dtype)


def prepare_params(weight, gamma, beta):
    """One-time (init-time) prep: transpose weight + cast to bf16, pack gamma/beta.

    The Linear bias is intentionally NOT used: it is mathematically cancelled by the
    training-mode BatchNorm mean-subtraction, so it is dead work in this fused block.
    """
    w_t = weight.T.astype(jnp.bfloat16)                                   # (K, N)
    gb = jnp.stack([gamma, beta], axis=0).astype(jnp.float32)             # (2, N)
    return w_t, gb


@jax.jit
def linear_layer_forward(x, w_t, gb):
    """x: (B, in_features) f32. Returns (B, out_features) f32 = relu(bn(linear(x)))."""
    batch = x.shape[0]
    n = w_t.shape[1]
    # No grid: operands are tiny and live in VMEM as single whole-array blocks.
    return pl.pallas_call(
        linear_bn_relu_kernel,
        out_shape=jax.ShapeDtypeStruct((batch, n), jnp.float32),
        in_specs=[pl.BlockSpec(memory_space=pltpu.MemorySpace.VMEM)] * 3,
        out_specs=pl.BlockSpec(memory_space=pltpu.MemorySpace.VMEM),
    )(x, w_t, gb)


if __name__ == "__main__":
    in_features, out_features = 32, 64
    batch = 8

    key = jax.random.PRNGKey(0)
    k_x, k_w, k_b = jax.random.split(key, 3)

    # Parameter init matching the PyTorch module:
    #   nn.init.normal_(weight, std=0.02); Linear bias ~ U(-1/sqrt(in), 1/sqrt(in));
    #   BatchNorm1d: gamma=1, beta=0.
    weight = 0.02 * jax.random.normal(k_w, (out_features, in_features), dtype=jnp.float32)
    bound = 1.0 / (in_features ** 0.5)
    bias = jax.random.uniform(k_b, (out_features,), minval=-bound, maxval=bound,
                              dtype=jnp.float32)
    gamma = jnp.ones((out_features,), dtype=jnp.float32)
    beta = jnp.zeros((out_features,), dtype=jnp.float32)

    x = jax.random.normal(k_x, (batch, in_features), dtype=jnp.float32)

    w_t, gb = prepare_params(weight, gamma, beta)

    out = linear_layer_forward(x, w_t, gb)
    jax.block_until_ready(out)

    # Reference (plain JAX, training-mode BN). Bias is INCLUDED here to verify that
    # dropping it in the kernel is semantics-preserving. Matmul operands are
    # bf16-quantized to match the kernel's in-kernel operand cast.
    xb = x.astype(jnp.bfloat16).astype(jnp.float32)
    wb = weight.astype(jnp.bfloat16).astype(jnp.float32)
    y_ref = xb @ wb.T + bias
    mean = y_ref.mean(axis=0, keepdims=True)
    var = ((y_ref - mean) ** 2).mean(axis=0, keepdims=True)
    ref = jnp.maximum(gamma * (y_ref - mean) / jnp.sqrt(var + EPS) + beta, 0.0)

    assert out.shape == (batch, out_features)
    assert jnp.allclose(out, ref, atol=1e-4, rtol=1e-4), float(jnp.max(jnp.abs(out - ref)))

    print("KERNEL_OK")
</pallas_src>

<mosaic_0001>
module attributes {stable_mosaic.version = 11 : i64} {
  func.func @linear_bn_relu_kernel(%arg0: memref<8x32xf32, #tpu.memory_space<vmem>>, %arg1: memref<32x64xbf16, #tpu.memory_space<vmem>>, %arg2: memref<2x64xf32, #tpu.memory_space<vmem>>, %arg3: memref<8x64xf32, #tpu.memory_space<vmem>>) attributes {dimension_semantics = [], scalar_prefetch = 0 : i64, scratch_operands = 0 : i64, tpu.core_type = #tpu.core_type<tc>} {
    %c0 = arith.constant 0 : index
    %c0_0 = arith.constant 0 : index
    %0 = vector.load %arg0[%c0, %c0_0] : memref<8x32xf32, #tpu.memory_space<vmem>>, vector<8x32xf32>
    %1 = arith.truncf %0 : vector<8x32xf32> to vector<8x32xbf16>
    %c0_1 = arith.constant 0 : index
    %c0_2 = arith.constant 0 : index
    %2 = vector.load %arg1[%c0_1, %c0_2] : memref<32x64xbf16, #tpu.memory_space<vmem>>, vector<32x64xbf16>
    %cst = arith.constant dense<0.000000e+00> : vector<8x64xf32>
    %3 = tpu.matmul %1, %2, %cst {dimension_numbers = #tpu.dot_dimension_numbers<[1], [0], [0], [1], [0, 0, 1, 1], [], []>} : vector<8x32xbf16>, vector<32x64xbf16>, vector<8x64xf32> -> vector<8x64xf32>
    %cst_3 = arith.constant dense<0.000000e+00> : vector<64xf32>
    %4 = vector.multi_reduction <add>, %3, %cst_3 [0] : vector<8x64xf32> to vector<64xf32>
    %5 = vector.shape_cast %4 : vector<64xf32> to vector<1x64xf32>
    %cst_4 = arith.constant 1.250000e-01 : f32
    %6 = vector.broadcast %cst_4 : f32 to vector<1x64xf32>
    %7 = arith.mulf %5, %6 : vector<1x64xf32>
    %8 = vector.broadcast %7 : vector<1x64xf32> to vector<8x64xf32>
    %9 = arith.subf %3, %8 : vector<8x64xf32>
    %10 = arith.mulf %9, %9 : vector<8x64xf32>
    %cst_5 = arith.constant dense<0.000000e+00> : vector<64xf32>
    %11 = vector.multi_reduction <add>, %10, %cst_5 [0] : vector<8x64xf32> to vector<64xf32>
    %12 = vector.shape_cast %11 : vector<64xf32> to vector<1x64xf32>
    %cst_6 = arith.constant 1.250000e-01 : f32
    %13 = vector.broadcast %cst_6 : f32 to vector<1x64xf32>
    %14 = arith.mulf %12, %13 : vector<1x64xf32>
    %cst_7 = arith.constant 9.99999974E-6 : f32
    %15 = vector.broadcast %cst_7 : f32 to vector<1x64xf32>
    %16 = arith.addf %14, %15 : vector<1x64xf32>
    %17 = math.rsqrt %16 : vector<1x64xf32>
    %c0_8 = arith.constant 0 : index
    %c0_9 = arith.constant 0 : index
    %18 = vector.load %arg2[%c0_8, %c0_9] : memref<2x64xf32, #tpu.memory_space<vmem>>, vector<1x64xf32>
    %c1 = arith.constant 1 : index
    %c0_10 = arith.constant 0 : index
    %19 = vector.load %arg2[%c1, %c0_10] : memref<2x64xf32, #tpu.memory_space<vmem>>, vector<1x64xf32>
    %20 = arith.mulf %18, %17 : vector<1x64xf32>
    %21 = vector.broadcast %20 : vector<1x64xf32> to vector<8x64xf32>
    %22 = arith.mulf %9, %21 : vector<8x64xf32>
    %23 = vector.broadcast %19 : vector<1x64xf32> to vector<8x64xf32>
    %24 = arith.addf %22, %23 : vector<8x64xf32>
    %cst_11 = arith.constant 0.000000e+00 : f32
    %25 = vector.broadcast %cst_11 : f32 to vector<8x64xf32>
    %26 = arith.maximumf %24, %25 : vector<8x64xf32>
    %c0_12 = arith.constant 0 : index
    %c0_13 = arith.constant 0 : index
    %27 = vector.load %arg3[%c0_12, %c0_13] : memref<8x64xf32, #tpu.memory_space<vmem>>, vector<8x64xf32>
    tpu.vector_store %arg3[%c0_12, %c0_13], %26 {strides = array<i32>} : memref<8x64xf32, #tpu.memory_space<vmem>>, vector<8x64xf32>,
    return
  }
}

</mosaic_0001>

<llo_original>
// kernel: linear_layer_forward.1
$region0: #{linear_layer_forward.1}
  #allocation0 [shape = 'u32[]', space=smem, size = 0x4, offset = 0x4, fixed_abs, tag = 'smem constant byte address 0x4 - core index']
  #allocation1 [shape = 'u32[144,128]{1,0:T(1,128)}', space=vmem, size = 0x12000, scoped, tag = 'internal scratch']
  %s0 = inlined_call_operand.hbm [shape: f32[8,32], index: 0, kind: input, shape index: {}]
  %s1 = inlined_call_operand.hbm [shape: bf16[32,64], index: 1, kind: input, shape index: {}]
  %s2 = inlined_call_operand.vmem [shape: f32[2,64], index: 2, kind: input, shape index: {}]
  %s3 = inlined_call_operand.hbm [shape: f32[8,64], index: 3, kind: output, shape index: {}]
  %s4 = sld [smem:[#allocation0]]
  $region30: #{linear_layer_forward.1} parent=0
    _
  %s6 = ssub.s32 1, %s4
  %s7 = scalar_select 0, %s6, %s4
  $region1: #{linear_layer_forward.1} parent=0
    #allocation2 [shape = 'u8[4096]{0}', space=vmem, size = 0x1000, scoped, tag = 'input window, operand 0, single buffered']
    #allocation3 [shape = 's32[1]{0}', space=sflag, size = 0x4, scoped, tag = 'scoped memory for linear_layer_forward.1']
    #allocation4 [shape = 's32[1]{0}', space=sflag, size = 0x4, scoped, tag = 'scoped memory for linear_layer_forward.1']
    #allocation5 [shape = 'u8[8192]{0}', space=vmem, size = 0x2000, scoped, tag = 'input window, operand 1, single buffered']
    #allocation6 [shape = 's32[1]{0}', space=sflag, size = 0x4, scoped, tag = 'scoped memory for linear_layer_forward.1']
    #allocation7 [shape = 'u8[4096]{0}', space=vmem, size = 0x1000, scoped, tag = 'output window, operand 0, single buffered']
    %8 = vsyncpa [#allocation3], 0
    %9 = vsyncpa [#allocation6], 0
    %10 = vsyncpa [#allocation4], 0
    // Predicated region
    $region2: #{linear_layer_forward.1} parent=1 // pred_check
      _
    $region3: #{linear_layer_forward.1} parent=1 // pred_check_branch
      %12 = sbr.rel (0) target = $region5
    $region4: #{linear_layer_forward.1} parent=1 // pred_region
      %s14 = ssub.s32 128, 128
      %15 = vsyncadd [#allocation3], %s14
      %s17 = sshll.u32 [#allocation2], 4
      %s18 = int_to_ptr.vmem [resolvable:$true] %s17
      %20 = dma.hbm_to_vmem [thread:$0]  %s0, 128, %s18, [#allocation3]
    $region5: #{linear_layer_forward.1} parent=1 // pred_fallthru
      _
    // Predicated region
    $region6: #{linear_layer_forward.1} parent=1 // pred_check
      _
    $region7: #{linear_layer_forward.1} parent=1 // pred_check_branch
      %22 = sbr.rel (0) target = $region9
    $region8: #{linear_layer_forward.1} parent=1 // pred_region
      %s24 = ssub.s32 256, 256
      %25 = vsyncadd [#allocation6], %s24
      %s26 = sshll.u32 [#allocation5], 4
      %s27 = int_to_ptr.vmem [resolvable:$true] %s26
      %32 = dma.hbm_to_vmem [thread:$0]  %s1, 256, %s27, [#allocation6], 64, 64, 4
    $region9: #{linear_layer_forward.1} parent=1 // pred_fallthru
      _
    // Predicated region
    $region10: #{linear_layer_forward.1} parent=1 // pred_check
      _
    $region11: #{linear_layer_forward.1} parent=1 // pred_check_branch
      %34 = sbr.rel (0) target = $region13
    $region12: #{linear_layer_forward.1} parent=1 // pred_region
      _
    $region13: #{linear_layer_forward.1} parent=1 // pred_fallthru
      _
    // Predicated region
    $region14: #{linear_layer_forward.1} parent=1 // pred_check
      _
    $region15: #{linear_layer_forward.1} parent=1 // pred_check_branch
      %36 = sbr.rel (0) target = $region17
    $region16: #{linear_layer_forward.1} parent=1 // pred_region
      %37 = dma.done [#allocation3], 128
    $region17: #{linear_layer_forward.1} parent=1 // pred_fallthru
      _
    // Predicated region
    $region18: #{linear_layer_forward.1} parent=1 // pred_check
      _
    $region19: #{linear_layer_forward.1} parent=1 // pred_check_branch
      %39 = sbr.rel (0) target = $region21
    $region20: #{linear_layer_forward.1} parent=1 // pred_region
      %40 = dma.done [#allocation6], 256
    $region21: #{linear_layer_forward.1} parent=1 // pred_fallthru
      _
    %v42 = vld [vmem:[#allocation2] sm:$0xff]
    %v43 = vpack.c.bf16 %v42, %v42
    %v44 = vld [vmem:[#allocation5] sm:$0xf]
    %v45 = vld [vmem:[#allocation5 + $0x4] sm:$0xf]
    %v46 = vld [vmem:[#allocation5 + $0x8] sm:$0xf]
    %v47 = vld [vmem:[#allocation5 + $0xc] sm:$0xf]
    %v52 = vunpack.c.l.b16 %v44
    %v53 = vunpack.c.l.b16 %v45
    %v54 = vunpack.c.l.b16 %v46
    %v55 = vunpack.c.l.b16 %v47
    %v56 = vpack.c.b16 %v53, %v52
    %v57 = vpack.c.b16 %v55, %v54
    %vm60 = vcmask 261120
    %v62 = vsel %vm60, %v43, 0
    %64 = vmatprep.subr.bf16.mxu0 0
    %65 = vmatpush1.bf16.msra.mxu0 %v56
    %66 = vmatprep.subr.bf16.mxu0 0
    %67 = vmatpush1.bf16.msra.mxu0 %v57
    %68 = vmatprep.subr.bf16.mxu0 0
    %69 = vmatpush1.bf16.msra.mxu0 0
    %70 = vmatprep.subr.bf16.mxu0 0
    %71 = vmatpush1.bf16.msra.mxu0 0
    %72 = vmatprep.subr.bf16.mxu0 0
    %73 = vmatpush1.bf16.msra.mxu0 0
    %74 = vmatprep.subr.bf16.mxu0 0
    %75 = vmatpush1.bf16.msra.mxu0 0
    %76 = vmatprep.subr.bf16.mxu0 0
    %77 = vmatpush1.bf16.msra.mxu0 0
    %78 = vmatprep.subr.bf16.mxu0 0
    %79 = vmatpush1.bf16.msra.mxu0 0
    %80 = vmatprep.subr.bf16.mxu0 0
    %81 = vmatpush1.bf16.msra.mxu0 0
    %82 = vmatprep.subr.bf16.mxu0 0
    %83 = vmatpush1.bf16.msra.mxu0 0
    %84 = vmatprep.subr.bf16.mxu0 0
    %85 = vmatpush1.bf16.msra.mxu0 0
    %86 = vmatprep.subr.bf16.mxu0 0
    %87 = vmatpush1.bf16.msra.mxu0 0
    %88 = vmatprep.subr.bf16.mxu0 0
    %89 = vmatpush1.bf16.msra.mxu0 0
    %90 = vmatprep.subr.bf16.mxu0 0
    %91 = vmatpush1.bf16.msra.mxu0 0
    %92 = vmatprep.subr.bf16.mxu0 0
    %93 = vmatpush1.bf16.msra.mxu0 0
    %94 = vmatprep.subr.bf16.mxu0 0
    %95 = vmatpush1.bf16.msra.mxu0 0
    %96 = vmatprep.mubr.bf16.mxu0 0
    %97 = vmatmul.mubr.bf16.gmra.mrb[0].mxu0 %v62
    %v98 = vpop.f32.mrb[0].mxu0
    %v99 = vadd.f32 0.0, %v98
    %v100 = vpop.f32.mrb[0].mxu0
    %v101 = vpop.f32.mrb[0].mxu0
    %v102 = vpop.f32.mrb[0].mxu0
    %103 = vdwg.mxu0
    %vm104 = vcmask 523264
    %v105 = vsel %vm104, %v99, 0.0
    %v106 = vrot.slane %v105, 4
    %v107 = vadd.f32 %v105, %v106
    %v108 = vrot.slane %v107, 2
    %v109 = vadd.f32 %v107, %v108
    %v110 = vrot.slane %v109, 1
    %v111 = vadd.f32 %v109, %v110
    %v112 = vmul.f32 %v111, 0.125
    %v113 = vsub.f32 %v99, %v112
    %v114 = vmul.f32 %v113, %v113
    %v115 = vsel %vm104, %v114, 0.0
    %v116 = vrot.slane %v115, 4
    %v117 = vadd.f32 %v115, %v116
    %v118 = vrot.slane %v117, 2
    %v119 = vadd.f32 %v117, %v118
    %v120 = vrot.slane %v119, 1
    %v121 = vadd.f32 %v119, %v120
    %v122 = vmul.f32 %v121, 0.125
    %v123 = vadd.f32 %v122, 1e-05
    %v124 = vrsqrt.pop %v123
    %v125 = vld [vmem:[%s2] sm:$0x1]
    %v126 = vld [vmem:[%s2 + $0x1] sm:$0x1]
    %v127 = vmul.f32 %v125, %v124
    %v128 = vlaneseq
    %v129 = vshrl.u32 %v128, 7
    %v130 = vsub.s32 0, %v129
    %v131 = vrot.slane %v127, %v130
    %v132 = vmul.f32 %v113, %v131
    %v133 = vlaneseq
    %v134 = vshrl.u32 %v133, 7
    %v135 = vsub.s32 0, %v134
    %v136 = vrot.slane %v126, %v135
    %v137 = vadd.f32 %v132, %v136
    %v138 = vmax.f32 %v137, 0.0
    %139 = vst.msk [vmem:[#allocation7] sm:$0xff] %vm104, %v138
    // Predicated region
    $region22: #{linear_layer_forward.1} parent=1 // pred_check
      _
    $region23: #{linear_layer_forward.1} parent=1 // pred_check_branch
      %141 = sbr.rel (0) target = $region25
    $region24: #{linear_layer_forward.1} parent=1 // pred_region
      %s143 = ssub.s32 128, 128
      %144 = vsyncadd [#allocation4], %s143
      %s146 = sshll.u32 [#allocation7], 4
      %s147 = int_to_ptr.vmem [resolvable:$true] %s146
      %149 = dma.vmem_to_hbm [thread:$0]  %s147, 128, %s3, [#allocation4]
    $region25: #{linear_layer_forward.1} parent=1 // pred_fallthru
      _
    // Predicated region
    $region26: #{linear_layer_forward.1} parent=1 // pred_check
      _
    $region27: #{linear_layer_forward.1} parent=1 // pred_check_branch
      %151 = sbr.rel (0) target = $region29
    $region28: #{linear_layer_forward.1} parent=1 // pred_region
      %152 = dma.done [#allocation4], 128
    $region29: #{linear_layer_forward.1} parent=1 // pred_fallthru
      _
    %153 = vsyncpa [#allocation3], 1
    %154 = vsyncpa [#allocation6], 1
    %155 = vsyncpa [#allocation4], 1

</llo_original>
